<compile_context>
chip_gen: v7x
topology: tpu7x:2x2x1
jax: 0.10.0
libtpu: 0.0.40
codegen_flags: <defaults>
</compile_context>

<pallas_src>
import math
import functools

import jax
import jax.numpy as jnp
from jax.experimental import pallas as pl
from jax.experimental.pallas import tpu as pltpu


# ----------------------------------------------------------------------------
# Kernel: fused 2-layer MLP (matmul -> bias -> activation -> matmul -> bias)
# ----------------------------------------------------------------------------
def _apply_activation(h, activation):
    # All activation math in f32 on the VPU/EUP (safe on v5e: no bf16 VPU there).
    if activation == "relu":
        return jnp.maximum(h, 0.0)
    if activation == "tanh":
        return jnp.tanh(h)
    if activation == "sigmoid":
        return jax.nn.sigmoid(h)
    if activation == "leaky_relu":
        return jnp.where(h >= 0.0, h, 0.01 * h)
    if activation == "softplus":
        return jax.nn.softplus(h)
    if activation == "identity":
        return h
    raise ValueError(f"unsupported activation: {activation}")
    # TODO(synk): 'softmax' last_layer_activation (dim-default nn.Softmax) not wired here.


def _mlp_kernel(x_ref, w1_ref, b1_ref, w2_ref, b2_ref, o_ref, *, activation):
    x = x_ref[...]
    w1 = w1_ref[...]
    # If weights are stored narrow (e.g. bf16 for v5e's bf16-native MXU), feed
    # the MXU matching operands; f32 weights keep the pure-f32 path.
    if w1.dtype != x.dtype:
        x = x.astype(w1.dtype)
    h = jnp.dot(x, w1, preferred_element_type=jnp.float32)
    h = h + b1_ref[...].astype(jnp.float32)          # (1, H) broadcasts over batch

    h = _apply_activation(h, activation)             # f32 elementwise

    w2 = w2_ref[...]
    if w2.dtype != jnp.float32:
        h = h.astype(w2.dtype)                       # bf16 weights -> bf16 MXU feed
    y = jnp.dot(h, w2, preferred_element_type=jnp.float32)
    y = y + b2_ref[...].astype(jnp.float32)          # (1, D_out) broadcasts

    o_ref[...] = y.astype(o_ref.dtype)


# ----------------------------------------------------------------------------
# Wrapper
# ----------------------------------------------------------------------------
def _round_up(n, m):
    return ((n + m - 1) // m) * m


def embedding_forward(x, w1, b1, w2, b2, *, activation="relu",
                      small_batch_max=1024, tm_max=4096, out_dtype=None):
    """Fused MLP forward.

    x  : (B, D_in)                 float32 (or bf16)
    w1 : (D_in, H)                 (pre-transposed torch Linear weight)
    b1 : (1, H) or (H,)
    w2 : (H, D_out)
    b2 : (1, D_out) or (D_out,)
    returns (B, D_out) in `out_dtype` (default: x.dtype)
    """
    B, D_in = x.shape
    H = w1.shape[1]
    D_out = w2.shape[1]
    out_dtype = x.dtype if out_dtype is None else out_dtype

    # Biases are expected pre-shaped (1, F) from init; only fix up if 1-D.
    if b1.ndim == 1:
        b1 = b1.reshape(1, H)
    if b2.ndim == 1:
        b2 = b2.reshape(1, D_out)

    kernel = functools.partial(_mlp_kernel, activation=activation)

    if B <= small_batch_max:
        # Small batch: no grid at all. Whole arrays are single VMEM-resident
        # blocks; no per-grid-step pipeline overhead, no double-buffering.
        return pl.pallas_call(
            kernel,
            out_shape=jax.ShapeDtypeStruct((B, D_out), out_dtype),
            in_specs=[pl.BlockSpec(memory_space=pltpu.MemorySpace.VMEM)] * 5,
            out_specs=pl.BlockSpec(memory_space=pltpu.MemorySpace.VMEM),
        )(x, w1, b1, w2, b2)

    # Large batch: tile only the batch axis; weights/biases keep a constant block
    # index so they stay VMEM-resident while x / y stream.
    #   tm: large enough to amortize the ~0.35 us/step pipeline cost, capped by a
    #   conservative streaming-VMEM budget, and sized so the "parallel" axis has
    #   at least 2 steps (v7x: work for both TensorCores; neutral on v5e/v6e).
    bytes_per_row = 4 * (D_in + D_out)                       # f32 in + out per row
    vmem_cap_rows = max(8, (((8 << 20) // (2 * bytes_per_row)) // 8) * 8)
    tm = min(tm_max, vmem_cap_rows, _round_up(pl.cdiv(B, 2), 8))
    grid = (pl.cdiv(B, tm),)   # ragged final block handled by Pallas (no XLA pad)

    return pl.pallas_call(
        kernel,
        out_shape=jax.ShapeDtypeStruct((B, D_out), out_dtype),
        grid=grid,
        in_specs=[
            pl.BlockSpec((tm, D_in), lambda i: (i, 0)),
            pl.BlockSpec((D_in, H), lambda i: (0, 0)),
            pl.BlockSpec((1, H), lambda i: (0, 0)),
            pl.BlockSpec((H, D_out), lambda i: (0, 0)),
            pl.BlockSpec((1, D_out), lambda i: (0, 0)),
        ],
        out_specs=pl.BlockSpec((tm, D_out), lambda i: (i, 0)),
        compiler_params=pltpu.CompilerParams(
            dimension_semantics=("parallel",)),              # v7x: shard over 2 TCs
    )(x, w1, b1, w2, b2)


# ----------------------------------------------------------------------------
# Deterministic parameter init (matches torch.nn.Linear default init scheme:
# uniform(-1/sqrt(fan_in), 1/sqrt(fan_in)) for both weight and bias).
# Weights are produced pre-transposed and biases pre-shaped, so the forward
# path has zero per-call reshapes/pads.
# ----------------------------------------------------------------------------
def init_linear(key, fan_in, fan_out):
    kw, kb = jax.random.split(key)
    bound = 1.0 / math.sqrt(fan_in)
    # stored as (fan_in, fan_out) == torch weight (fan_out, fan_in) transposed
    w = jax.random.uniform(kw, (fan_in, fan_out), jnp.float32, -bound, bound)
    b = jax.random.uniform(kb, (1, fan_out), jnp.float32, -bound, bound)
    return w, b


def _reference(x, w1, b1, w2, b2, activation):
    h = x @ w1 + b1
    if activation == "relu":
        h = jnp.maximum(h, 0.0)
    return h @ w2 + b2


if __name__ == "__main__":
    # Embedding(input_size=32, output_size=16, hidden_layers=[128],
    #           non_linear=True, activation='relu')
    batch, input_size, hidden, output_size = 8, 32, 128, 16

    key = jax.random.PRNGKey(0)
    kx, k1, k2, kx_big = jax.random.split(key, 4)

    x = jax.random.normal(kx, (batch, input_size), jnp.float32)
    w1, b1 = init_linear(k1, input_size, hidden)
    w2, b2 = init_linear(k2, hidden, output_size)

    # Small-batch (grid-less, single VMEM block) path.
    out = jax.block_until_ready(
        embedding_forward(x, w1, b1, w2, b2, activation="relu"))
    y_ref = _reference(x, w1, b1, w2, b2, "relu")
    assert out.shape == (batch, output_size)
    assert jnp.allclose(out, y_ref, atol=2e-5, rtol=2e-5)

    # Large-batch (gridded, weights resident, ragged final block, >=2 "parallel"
    # steps) path.
    big_batch = 2500
    x_big = jax.random.normal(kx_big, (big_batch, input_size), jnp.float32)
    out_big = jax.block_until_ready(
        embedding_forward(x_big, w1, b1, w2, b2, activation="relu"))
    y_big_ref = _reference(x_big, w1, b1, w2, b2, "relu")
    assert out_big.shape == (big_batch, output_size)
    assert jnp.allclose(out_big, y_big_ref, atol=2e-5, rtol=2e-5)

    print("KERNEL_OK")
</pallas_src>

<mosaic_0001>
module attributes {stable_mosaic.version = 11 : i64} {
  func.func @_mlp_kernel(%arg0: memref<8x32xf32, #tpu.memory_space<vmem>>, %arg1: memref<32x128xf32, #tpu.memory_space<vmem>>, %arg2: memref<1x128xf32, #tpu.memory_space<vmem>>, %arg3: memref<128x16xf32, #tpu.memory_space<vmem>>, %arg4: memref<1x16xf32, #tpu.memory_space<vmem>>, %arg5: memref<8x16xf32, #tpu.memory_space<vmem>>) attributes {dimension_semantics = [], scalar_prefetch = 0 : i64, scratch_operands = 0 : i64, tpu.core_type = #tpu.core_type<tc>} {
    %c0 = arith.constant 0 : index
    %c0_0 = arith.constant 0 : index
    %0 = vector.load %arg0[%c0, %c0_0] : memref<8x32xf32, #tpu.memory_space<vmem>>, vector<8x32xf32>
    %c0_1 = arith.constant 0 : index
    %c0_2 = arith.constant 0 : index
    %1 = vector.load %arg1[%c0_1, %c0_2] : memref<32x128xf32, #tpu.memory_space<vmem>>, vector<32x128xf32>
    %cst = arith.constant dense<0.000000e+00> : vector<8x128xf32>
    %2 = tpu.matmul %0, %1, %cst {dimension_numbers = #tpu.dot_dimension_numbers<[1], [0], [0], [1], [0, 0, 1, 1], [], []>} : vector<8x32xf32>, vector<32x128xf32>, vector<8x128xf32> -> vector<8x128xf32>
    %c0_3 = arith.constant 0 : index
    %c0_4 = arith.constant 0 : index
    %3 = vector.load %arg2[%c0_3, %c0_4] : memref<1x128xf32, #tpu.memory_space<vmem>>, vector<1x128xf32>
    %4 = vector.broadcast %3 : vector<1x128xf32> to vector<8x128xf32>
    %5 = arith.addf %2, %4 : vector<8x128xf32>
    %cst_5 = arith.constant 0.000000e+00 : f32
    %6 = vector.broadcast %cst_5 : f32 to vector<8x128xf32>
    %7 = arith.maximumf %5, %6 : vector<8x128xf32>
    %c0_6 = arith.constant 0 : index
    %c0_7 = arith.constant 0 : index
    %8 = vector.load %arg3[%c0_6, %c0_7] : memref<128x16xf32, #tpu.memory_space<vmem>>, vector<128x16xf32>
    %cst_8 = arith.constant dense<0.000000e+00> : vector<8x16xf32>
    %9 = tpu.matmul %7, %8, %cst_8 {dimension_numbers = #tpu.dot_dimension_numbers<[1], [0], [0], [1], [0, 0, 1, 1], [], []>} : vector<8x128xf32>, vector<128x16xf32>, vector<8x16xf32> -> vector<8x16xf32>
    %c0_9 = arith.constant 0 : index
    %c0_10 = arith.constant 0 : index
    %10 = vector.load %arg4[%c0_9, %c0_10] : memref<1x16xf32, #tpu.memory_space<vmem>>, vector<1x16xf32>
    %11 = vector.broadcast %10 : vector<1x16xf32> to vector<8x16xf32>
    %12 = arith.addf %9, %11 : vector<8x16xf32>
    %c0_11 = arith.constant 0 : index
    %c0_12 = arith.constant 0 : index
    %13 = vector.load %arg5[%c0_11, %c0_12] : memref<8x16xf32, #tpu.memory_space<vmem>>, vector<8x16xf32>
    tpu.vector_store %arg5[%c0_11, %c0_12], %12 {strides = array<i32>} : memref<8x16xf32, #tpu.memory_space<vmem>>, vector<8x16xf32>,
    return
  }
}

</mosaic_0001>

<llo_original>
// kernel: tpu_custom_call.1
$region0: #{tpu_custom_call.1}
  #allocation0 [shape = 'u32[]', space=smem, size = 0x4, offset = 0x4, fixed_abs, tag = 'smem constant byte address 0x4 - core index']
  #allocation1 [shape = 'u32[144,128]{1,0:T(1,128)}', space=vmem, size = 0x12000, scoped, tag = 'internal scratch']
  %s0 = inlined_call_operand.vmem [shape: f32[8,32], index: 0, kind: input, shape index: {}]
  %s1 = inlined_call_operand.vmem [shape: f32[32,128], index: 1, kind: input, shape index: {}]
  %s2 = inlined_call_operand.vmem [shape: f32[1,128], index: 2, kind: input, shape index: {}]
  %s3 = inlined_call_operand.vmem [shape: f32[128,16], index: 3, kind: input, shape index: {}]
  %s4 = inlined_call_operand.vmem [shape: f32[1,16], index: 4, kind: input, shape index: {}]
  %s5 = inlined_call_operand.hbm [shape: f32[8,16], index: 5, kind: output, shape index: {}]
  %s6 = sld [smem:[#allocation0]]
  $region30: #{tpu_custom_call.1} parent=0
    _
  %s8 = ssub.s32 1, %s6
  %s9 = scalar_select 0, %s8, %s6
  $region1: #{tpu_custom_call.1} parent=0
    #allocation2 [shape = 'u8[4096]{0}', space=vmem, size = 0x1000, scoped, tag = 'output window, operand 0, single buffered']
    #allocation3 [shape = 's32[1]{0}', space=sflag, size = 0x4, scoped, tag = 'scoped memory for tpu_custom_call.1']
    %10 = vsyncpa [#allocation3], 0
    // Predicated region
    $region2: #{tpu_custom_call.1} parent=1 // pred_check
      _
    $region3: #{tpu_custom_call.1} parent=1 // pred_check_branch
      %12 = sbr.rel (0) target = $region5
    $region4: #{tpu_custom_call.1} parent=1 // pred_region
      _
    $region5: #{tpu_custom_call.1} parent=1 // pred_fallthru
      _
    // Predicated region
    $region6: #{tpu_custom_call.1} parent=1 // pred_check
      _
    $region7: #{tpu_custom_call.1} parent=1 // pred_check_branch
      %14 = sbr.rel (0) target = $region9
    $region8: #{tpu_custom_call.1} parent=1 // pred_region
      _
    $region9: #{tpu_custom_call.1} parent=1 // pred_fallthru
      _
    // Predicated region
    $region10: #{tpu_custom_call.1} parent=1 // pred_check
      _
    $region11: #{tpu_custom_call.1} parent=1 // pred_check_branch
      %16 = sbr.rel (0) target = $region13
    $region12: #{tpu_custom_call.1} parent=1 // pred_region
      _
    $region13: #{tpu_custom_call.1} parent=1 // pred_fallthru
      _
    // Predicated region
    $region14: #{tpu_custom_call.1} parent=1 // pred_check
      _
    $region15: #{tpu_custom_call.1} parent=1 // pred_check_branch
      %18 = sbr.rel (0) target = $region17
    $region16: #{tpu_custom_call.1} parent=1 // pred_region
      _
    $region17: #{tpu_custom_call.1} parent=1 // pred_fallthru
      _
    // Predicated region
    $region18: #{tpu_custom_call.1} parent=1 // pred_check
      _
    $region19: #{tpu_custom_call.1} parent=1 // pred_check_branch
      %20 = sbr.rel (0) target = $region21
    $region20: #{tpu_custom_call.1} parent=1 // pred_region
      _
    $region21: #{tpu_custom_call.1} parent=1 // pred_fallthru
      _
    %v21 = vld [vmem:[%s0] sm:$0xff]
    %v22 = vld [vmem:[%s1] sm:$0xff]
    %v23 = vld [vmem:[%s1 + $0x8] sm:$0xff]
    %v24 = vld [vmem:[%s1 + $0x10] sm:$0xff]
    %v25 = vld [vmem:[%s1 + $0x18] sm:$0xff]
    %v26 = vld [vmem:[%s2] sm:$0x1]
    %v28 = vlaneseq
    %v29 = vshrl.u32 %v28, 7
    %v30 = vsub.s32 0, %v29
    %v31 = vrot.slane %v26, %v30
    %vm33 = vcmask 261120
    %v35 = vsel %vm33, %v21, 0
    %37 = vmatprep.subr.mxu0 0.0
    %38 = vmatpush1.msra.mxu0 %v22
    %39 = vmatprep.subr.mxu0 0.0
    %40 = vmatpush1.msra.mxu0 %v23
    %41 = vmatprep.subr.mxu0 0.0
    %42 = vmatpush1.msra.mxu0 %v24
    %43 = vmatprep.subr.mxu0 0.0
    %44 = vmatpush1.msra.mxu0 %v25
    %45 = vmatprep.subr.mxu0 0.0
    %46 = vmatpush1.msra.mxu0 0.0
    %47 = vmatprep.subr.mxu0 0.0
    %48 = vmatpush1.msra.mxu0 0.0
    %49 = vmatprep.subr.mxu0 0.0
    %50 = vmatpush1.msra.mxu0 0.0
    %51 = vmatprep.subr.mxu0 0.0
    %52 = vmatpush1.msra.mxu0 0.0
    %53 = vmatprep.subr.mxu0 0.0
    %54 = vmatpush1.msra.mxu0 0.0
    %55 = vmatprep.subr.mxu0 0.0
    %56 = vmatpush1.msra.mxu0 0.0
    %57 = vmatprep.subr.mxu0 0.0
    %58 = vmatpush1.msra.mxu0 0.0
    %59 = vmatprep.subr.mxu0 0.0
    %60 = vmatpush1.msra.mxu0 0.0
    %61 = vmatprep.subr.mxu0 0.0
    %62 = vmatpush1.msra.mxu0 0.0
    %63 = vmatprep.subr.mxu0 0.0
    %64 = vmatpush1.msra.mxu0 0.0
    %65 = vmatprep.subr.mxu0 0.0
    %66 = vmatpush1.msra.mxu0 0.0
    %67 = vmatprep.subr.mxu0 0.0
    %68 = vmatpush1.msra.mxu0 0.0
    %69 = vmatprep.subr.mxu0 0.0
    %70 = vmatpush1.msra.mxu0 0.0
    %71 = vmatprep.subr.mxu0 0.0
    %72 = vmatpush1.msra.mxu0 0.0
    %73 = vmatprep.subr.mxu0 0.0
    %74 = vmatpush1.msra.mxu0 0.0
    %75 = vmatprep.subr.mxu0 0.0
    %76 = vmatpush1.msra.mxu0 0.0
    %77 = vmatprep.subr.mxu0 0.0
    %78 = vmatpush1.msra.mxu0 0.0
    %79 = vmatprep.subr.mxu0 0.0
    %80 = vmatpush1.msra.mxu0 0.0
    %81 = vmatprep.subr.mxu0 0.0
    %82 = vmatpush1.msra.mxu0 0.0
    %83 = vmatprep.subr.mxu0 0.0
    %84 = vmatpush1.msra.mxu0 0.0
    %85 = vmatprep.subr.mxu0 0.0
    %86 = vmatpush1.msra.mxu0 0.0
    %87 = vmatprep.subr.mxu0 0.0
    %88 = vmatpush1.msra.mxu0 0.0
    %89 = vmatprep.subr.mxu0 0.0
    %90 = vmatpush1.msra.mxu0 0.0
    %91 = vmatprep.subr.mxu0 0.0
    %92 = vmatpush1.msra.mxu0 0.0
    %93 = vmatprep.subr.mxu0 0.0
    %94 = vmatpush1.msra.mxu0 0.0
    %95 = vmatprep.subr.mxu0 0.0
    %96 = vmatpush1.msra.mxu0 0.0
    %97 = vmatprep.subr.mxu0 0.0
    %98 = vmatpush1.msra.mxu0 0.0
    %99 = vmatprep.subr.mxu0 0.0
    %100 = vmatpush1.msra.mxu0 0.0
    %101 = vmatprep.mubr.f32.mxu0 0.0
    %102 = vmatmul.mubr.f32.gmra.mrb[0].mxu0 %v35
    %v103 = vpop.f32.mrb[0].mxu0
    %v104 = vadd.f32 %v31, %v103
    %v105 = vpop.f32.mrb[0].mxu0
    %106 = vdwg.mxu0
    %v107 = vmax.f32 %v104, 0.0
    %v108 = vld [vmem:[%s3] sm:$0xff]
    %v109 = vld [vmem:[%s3 + $0x8] sm:$0xff]
    %v110 = vld [vmem:[%s3 + $0x10] sm:$0xff]
    %v111 = vld [vmem:[%s3 + $0x18] sm:$0xff]
    %v112 = vld [vmem:[%s3 + $0x20] sm:$0xff]
    %v113 = vld [vmem:[%s3 + $0x28] sm:$0xff]
    %v114 = vld [vmem:[%s3 + $0x30] sm:$0xff]
    %v115 = vld [vmem:[%s3 + $0x38] sm:$0xff]
    %v116 = vld [vmem:[%s3 + $0x40] sm:$0xff]
    %v117 = vld [vmem:[%s3 + $0x48] sm:$0xff]
    %v118 = vld [vmem:[%s3 + $0x50] sm:$0xff]
    %v119 = vld [vmem:[%s3 + $0x58] sm:$0xff]
    %v120 = vld [vmem:[%s3 + $0x60] sm:$0xff]
    %v121 = vld [vmem:[%s3 + $0x68] sm:$0xff]
    %v122 = vld [vmem:[%s3 + $0x70] sm:$0xff]
    %v123 = vld [vmem:[%s3 + $0x78] sm:$0xff]
    %v124 = vld [vmem:[%s4] sm:$0x1]
    %v126 = vlaneseq
    %v127 = vshrl.u32 %v126, 7
    %v128 = vsub.s32 0, %v127
    %v129 = vrot.slane %v124, %v128
    %131 = vmatprep.subr.mxu0 0.0
    %132 = vmatpush1.msra.mxu0 %v108
    %133 = vmatprep.subr.mxu0 0.0
    %134 = vmatpush1.msra.mxu0 %v109
    %135 = vmatprep.subr.mxu0 0.0
    %136 = vmatpush1.msra.mxu0 %v110
    %137 = vmatprep.subr.mxu0 0.0
    %138 = vmatpush1.msra.mxu0 %v111
    %139 = vmatprep.subr.mxu0 0.0
    %140 = vmatpush1.msra.mxu0 %v112
    %141 = vmatprep.subr.mxu0 0.0
    %142 = vmatpush1.msra.mxu0 %v113
    %143 = vmatprep.subr.mxu0 0.0
    %144 = vmatpush1.msra.mxu0 %v114
    %145 = vmatprep.subr.mxu0 0.0
    %146 = vmatpush1.msra.mxu0 %v115
    %147 = vmatprep.subr.mxu0 0.0
    %148 = vmatpush1.msra.mxu0 %v116
    %149 = vmatprep.subr.mxu0 0.0
    %150 = vmatpush1.msra.mxu0 %v117
    %151 = vmatprep.subr.mxu0 0.0
    %152 = vmatpush1.msra.mxu0 %v118
    %153 = vmatprep.subr.mxu0 0.0
    %154 = vmatpush1.msra.mxu0 %v119
    %155 = vmatprep.subr.mxu0 0.0
    %156 = vmatpush1.msra.mxu0 %v120
    %157 = vmatprep.subr.mxu0 0.0
    %158 = vmatpush1.msra.mxu0 %v121
    %159 = vmatprep.subr.mxu0 0.0
    %160 = vmatpush1.msra.mxu0 %v122
    %161 = vmatprep.subr.mxu0 0.0
    %162 = vmatpush1.msra.mxu0 %v123
    %163 = vmatprep.subr.mxu0 0.0
    %164 = vmatpush1.msra.mxu0 0.0
    %165 = vmatprep.subr.mxu0 0.0
    %166 = vmatpush1.msra.mxu0 0.0
    %167 = vmatprep.subr.mxu0 0.0
    %168 = vmatpush1.msra.mxu0 0.0
    %169 = vmatprep.subr.mxu0 0.0
    %170 = vmatpush1.msra.mxu0 0.0
    %171 = vmatprep.subr.mxu0 0.0
    %172 = vmatpush1.msra.mxu0 0.0
    %173 = vmatprep.subr.mxu0 0.0
    %174 = vmatpush1.msra.mxu0 0.0
    %175 = vmatprep.subr.mxu0 0.0
    %176 = vmatpush1.msra.mxu0 0.0
    %177 = vmatprep.subr.mxu0 0.0
    %178 = vmatpush1.msra.mxu0 0.0
    %179 = vmatprep.subr.mxu0 0.0
    %180 = vmatpush1.msra.mxu0 0.0
    %181 = vmatprep.subr.mxu0 0.0
    %182 = vmatpush1.msra.mxu0 0.0
    %183 = vmatprep.subr.mxu0 0.0
    %184 = vmatpush1.msra.mxu0 0.0
    %185 = vmatprep.subr.mxu0 0.0
    %186 = vmatpush1.msra.mxu0 0.0
    %187 = vmatprep.subr.mxu0 0.0
    %188 = vmatpush1.msra.mxu0 0.0
    %189 = vmatprep.subr.mxu0 0.0
    %190 = vmatpush1.msra.mxu0 0.0
    %191 = vmatprep.subr.mxu0 0.0
    %192 = vmatpush1.msra.mxu0 0.0
    %193 = vmatprep.subr.mxu0 0.0
    %194 = vmatpush1.msra.mxu0 0.0
    %195 = vmatprep.mubr.f32.mxu0 0.0
    %196 = vmatmul.mubr.f32.gmra.mrb[0].mxu0 %v107
    %v197 = vpop.f32.mrb[0].mxu0
    %v198 = vadd.f32 %v129, %v197
    %v199 = vpop.f32.mrb[0].mxu0
    %200 = vdwg.mxu0
    %vm201 = vcmask 130048
    %202 = vst.msk [vmem:[#allocation2] sm:$0xff] %vm201, %v198
    // Predicated region
    $region22: #{tpu_custom_call.1} parent=1 // pred_check
      _
    $region23: #{tpu_custom_call.1} parent=1 // pred_check_branch
      %204 = sbr.rel (0) target = $region25
    $region24: #{tpu_custom_call.1} parent=1 // pred_region
      %s206 = ssub.s32 128, 128
      %207 = vsyncadd [#allocation3], %s206
      %s209 = sshll.u32 [#allocation2], 4
      %s210 = int_to_ptr.vmem [resolvable:$true] %s209
      %212 = dma.vmem_to_hbm [thread:$0]  %s210, 128, %s5, [#allocation3]
    $region25: #{tpu_custom_call.1} parent=1 // pred_fallthru
      _
    // Predicated region
    $region26: #{tpu_custom_call.1} parent=1 // pred_check
      _
    $region27: #{tpu_custom_call.1} parent=1 // pred_check_branch
      %214 = sbr.rel (0) target = $region29
    $region28: #{tpu_custom_call.1} parent=1 // pred_region
      %215 = dma.done [#allocation3], 128
    $region29: #{tpu_custom_call.1} parent=1 // pred_fallthru
      _
    %216 = vsyncpa [#allocation3], 1

</llo_original>
